<compile_context>
chip_gen: v5e
topology: v5e:2x2
jax: 0.10.0
libtpu: 0.0.40
codegen_flags: <defaults>
</compile_context>

<pallas_src>
import functools
import math

import jax
import jax.numpy as jnp
from jax import lax
from jax.experimental import pallas as pl
from jax.experimental.pallas import tpu as pltpu


def _mha_kernel(x_ref, mask_ref, wqkv_ref, bq_ref, bv_ref, wo_ref, bo_ref,
                o_ref, acc_ref, *,
                num_groups: int, heads_per_group: int, head_size: int,
                exp_dtype):
    """One grid step == one (batch, head-group) pair.

    x_ref:    (1, S, H)          mask_ref:      (1, 1, 1, S)
    wqkv_ref: (NG, H, 3*D)       bq_ref/bv_ref: (NG, 1, D)   (D = HG*hs)
    wo_ref:   (NG, D, H)         bo_ref:        (1, H)
    o_ref:    (1, S, H)          acc_ref:       (S, H) f32 scratch (persists over groups)
    """
    g = pl.program_id(1)
    hs = head_size
    HG = heads_per_group
    D = HG * hs

    x = x_ref[0]                                   # (S, H), input dtype
    dt = x.dtype

    # Fused per-group QKV projection: one (S,H)@(H,3D) matmul, f32 accumulation,
    # weights already in "x @ W" orientation (no in-kernel transpose).
    qkv = jnp.dot(x, wqkv_ref[g], preferred_element_type=jnp.float32)   # (S, 3D)

    # q/k/v column blocks at D-aligned offsets (128-aligned for hs=64, HG=2).
    # 1/sqrt(hs) is pre-folded into Wq/bq; bK is dropped (softmax shift
    # invariance); bV is kept.
    qf = qkv[:, :D] + bq_ref[g].astype(jnp.float32)
    kf = qkv[:, D:2 * D]
    vf = qkv[:, 2 * D:] + bv_ref[g].astype(jnp.float32)
    q = qf.astype(dt)
    k = kf.astype(dt)
    v = vf.astype(dt)

    mask_row = mask_ref[0, 0].astype(jnp.float32)  # (1, S) additive key mask

    attn_heads = []
    for h in range(HG):                            # static unroll, HG is 1 or 2
        sl = slice(h * hs, (h + 1) * hs)
        q_h, k_h, v_h = q[:, sl], k[:, sl], v[:, sl]
        # scores = q @ k^T via "nt" dot_general -- MXU handles the transposed
        # contraction natively, no XLU transpose is materialized.
        s_h = lax.dot_general(q_h, k_h,
                              dimension_numbers=(((1,), (1,)), ((), ())),
                              preferred_element_type=jnp.float32)       # (S, S)
        s_h = s_h + mask_row
        m = jnp.max(s_h, axis=-1, keepdims=True)
        e = jnp.exp((s_h - m).astype(exp_dtype))
        denom = jnp.sum(e.astype(jnp.float32), axis=-1, keepdims=True)
        av = jnp.dot(e.astype(dt), v_h, preferred_element_type=jnp.float32)  # (S, hs)
        # Exact divide on the small (S, hs) AV tile (normalization deferred
        # past the PV matmul; exact => tight parity with the PyTorch module).
        attn_heads.append((av / denom).astype(dt))

    attn_grp = jnp.concatenate(attn_heads, axis=-1)          # (S, D), head-major cols

    # This group's contribution to the output projection (contraction K = D).
    contrib = jnp.dot(attn_grp, wo_ref[g], preferred_element_type=jnp.float32)

    @pl.when(g == 0)
    def _():
        acc_ref[...] = contrib          # direct store: no zero-fill + RMW at group 0

    @pl.when(g > 0)
    def _():
        acc_ref[...] += contrib

    @pl.when(g == num_groups - 1)
    def _():
        o_ref[0] = (acc_ref[...] + bo_ref[...].astype(jnp.float32)).astype(o_ref.dtype)


def prepare_mha_params(params, num_heads, *, heads_per_group=None):
    """One-time weight re-layout. Call at parameter-load time, NOT per forward."""
    wq, bq, wk, bk, wv, bv, wo, bo = params
    H = wq.shape[0]
    assert H % num_heads == 0, "hidden must be divisible by num_heads"
    hs = H // num_heads
    if heads_per_group is None:
        heads_per_group = 2 if num_heads % 2 == 0 else 1
    assert num_heads % heads_per_group == 0
    HG = heads_per_group
    NG = num_heads // HG
    D = HG * hs
    scale = 1.0 / math.sqrt(hs)

    def per_head(w):
        # nn.Linear does x @ W.T; per-head "x @ W" orientation: (NH, H, hs).
        return jnp.transpose(w.T.reshape(H, num_heads, hs), (1, 0, 2))

    def per_group(wh):
        # (NH, H, hs) -> (NG, H, HG*hs), heads of a group side by side.
        return jnp.transpose(wh.reshape(NG, HG, H, hs), (0, 2, 1, 3)).reshape(NG, H, D)

    wq_h = per_head(wq) * scale            # fold 1/sqrt(hs) into Q weights
    wqkv_g = jnp.concatenate(
        [per_group(wq_h), per_group(per_head(wk)), per_group(per_head(wv))],
        axis=-1)                                                   # (NG, H, 3D)
    bq_g = (bq * scale).reshape(NG, 1, D)                          # scaled Q bias
    bv_g = bv.reshape(NG, 1, D)
    # bK is dropped: q . bK is constant across keys -> cancels under row softmax.
    wo_g = wo.T.reshape(NG, D, H)                                  # (NG, D, H)
    bo2 = bo.reshape(1, H)
    return dict(wqkv=wqkv_g, bq=bq_g, bv=bv_g, wo=wo_g, bo=bo2,
                num_heads=num_heads, heads_per_group=HG, num_groups=NG,
                head_size=hs, hidden=H)


def multihead_attention_prepared(x, mask, prepared, *, softmax_exp_dtype=None):
    """x: (B, S, H), mask: (B, 1, 1, S) additive mask, prepared: prepare_mha_params()."""
    B, S, H = x.shape
    assert H == prepared["hidden"]
    NG = prepared["num_groups"]
    HG = prepared["heads_per_group"]
    hs = prepared["head_size"]
    D = HG * hs
    wqkv_g, bq_g, bv_g, wo_g, bo2 = (prepared[k] for k in ("wqkv", "bq", "bv", "wo", "bo"))
    # f32 exp by default; pass jnp.bfloat16 on v6e/v7x bf16 runs (NOT on v5e).
    exp_dtype = jnp.float32 if softmax_exp_dtype is None else softmax_exp_dtype

    kernel = functools.partial(_mha_kernel, num_groups=NG, heads_per_group=HG,
                               head_size=hs, exp_dtype=exp_dtype)

    # Explicit VMEM budget: single-buffered resident weights + double-buffered
    # x/out blocks + f32 accumulator + live f32 temporaries (qkv, scores, exp, av).
    sz = lambda a: a.size * a.dtype.itemsize
    weight_bytes = sz(wqkv_g) + sz(bq_g) + sz(bv_g) + sz(wo_g) + sz(bo2)
    xb = x.dtype.itemsize
    io_bytes = 2 * 2 * S * H * xb + 2 * 4 * S
    live_bytes = S * 3 * D * 4 + 2 * S * S * 4 + S * D * (4 + xb) + S * H * 4
    est = weight_bytes + io_bytes + live_bytes
    vmem_limit = int(min(max(2 * est, 32 * 1024 * 1024), 96 * 1024 * 1024))

    resident = dict(pipeline_mode=pl.Buffered(1))   # constant index_map => single-buffer

    return pl.pallas_call(
        kernel,
        out_shape=jax.ShapeDtypeStruct((B, S, H), x.dtype),
        grid_spec=pltpu.PrefetchScalarGridSpec(
            num_scalar_prefetch=0,
            grid=(B, NG),                            # head-groups = inner reduction axis
            in_specs=[
                pl.BlockSpec((1, S, H), lambda b, g: (b, 0, 0)),             # x
                pl.BlockSpec((1, 1, 1, S), lambda b, g: (b, 0, 0, 0)),       # mask
                pl.BlockSpec((NG, H, 3 * D), lambda b, g: (0, 0, 0), **resident),  # Wqkv
                pl.BlockSpec((NG, 1, D), lambda b, g: (0, 0, 0), **resident),      # bq (scaled)
                pl.BlockSpec((NG, 1, D), lambda b, g: (0, 0, 0), **resident),      # bv
                pl.BlockSpec((NG, D, H), lambda b, g: (0, 0, 0), **resident),      # Wo
                pl.BlockSpec((1, H), lambda b, g: (0, 0), **resident),             # bo
            ],
            out_specs=pl.BlockSpec((1, S, H), lambda b, g: (b, 0, 0)),
            scratch_shapes=[pltpu.VMEM((S, H), jnp.float32)],                # output acc
        ),
        compiler_params=pltpu.CompilerParams(
            dimension_semantics=("parallel", "arbitrary"),
            vmem_limit_bytes=vmem_limit),
    )(x, mask, wqkv_g, bq_g, bv_g, wo_g, bo2)


def multihead_attention(x, mask, params, num_heads, **kw):
    """Convenience wrapper. In production, call prepare_mha_params() once at
    parameter-load time and reuse the result across forward calls."""
    return multihead_attention_prepared(x, mask, prepare_mha_params(params, num_heads), **kw)


def _reference(x, mask, params, num_heads):
    """Pure-JAX reference mirroring the PyTorch module."""
    wq, bq, wk, bk, wv, bv, wo, bo = params
    B, S, H = x.shape
    hs = H // num_heads
    Q = x @ wq.T + bq
    K = x @ wk.T + bk
    V = x @ wv.T + bv
    q = Q.reshape(B, S, num_heads, hs)
    k = K.reshape(B, S, num_heads, hs)
    v = V.reshape(B, S, num_heads, hs)
    scores = jnp.einsum('bqnh,bknh->bnqk', q, k) / math.sqrt(hs)
    scores = scores + mask  # (B,1,1,S) broadcasts over heads/queries
    probs = jax.nn.softmax(scores, axis=-1)
    av = jnp.einsum('bnqk,bknh->bqnh', probs, v).reshape(B, S, H)
    return av @ wo.T + bo


if __name__ == "__main__":
    B, S, H, NH = 2, 8, 32, 4

    key = jax.random.PRNGKey(0)
    keys = jax.random.split(key, 10)

    bound = 1.0 / math.sqrt(H)

    def lin(kw_, kb_):
        w = jax.random.uniform(kw_, (H, H), jnp.float32, -bound, bound)
        b = jax.random.uniform(kb_, (H,), jnp.float32, -bound, bound)
        return w, b

    wq, bq = lin(keys[0], keys[1])
    wk, bk = lin(keys[2], keys[3])
    wv, bv = lin(keys[4], keys[5])
    wo, bo = lin(keys[6], keys[7])
    params = (wq, bq, wk, bk, wv, bv, wo, bo)

    x = jax.random.normal(keys[8], (B, S, H), jnp.float32)
    # additive attention mask: mask out last 2 key positions of batch 1
    mask = jnp.zeros((B, 1, 1, S), jnp.float32)
    mask = mask.at[1, 0, 0, -2:].set(-1e4)

    prepared = prepare_mha_params(params, NH)          # once, at "load time"
    out = multihead_attention_prepared(x, mask, prepared)
    out = jax.block_until_ready(out)

    ref = _reference(x, mask, params, NH)
    assert out.shape == (B, S, H)
    # exact divide (no approx reciprocal) => tight tolerance
    assert jnp.allclose(out, ref, atol=1e-3, rtol=1e-3), float(jnp.max(jnp.abs(out - ref)))

    print("KERNEL_OK")
</pallas_src>

<mosaic_0001>
module attributes {stable_mosaic.version = 11 : i64} {
  func.func @_mha_kernel(%arg0: i32, %arg1: i32, %arg2: memref<1x8x32xf32, #tpu.memory_space<vmem>>, %arg3: memref<1x1x1x8xf32, #tpu.memory_space<vmem>>, %arg4: memref<2x32x48xf32, #tpu.memory_space<vmem>>, %arg5: memref<2x1x16xf32, #tpu.memory_space<vmem>>, %arg6: memref<2x1x16xf32, #tpu.memory_space<vmem>>, %arg7: memref<2x16x32xf32, #tpu.memory_space<vmem>>, %arg8: memref<1x32xf32, #tpu.memory_space<vmem>>, %arg9: memref<1x8x32xf32, #tpu.memory_space<vmem>>, %arg10: memref<8x32xf32, #tpu.memory_space<vmem>>) attributes {dimension_semantics = [#tpu.dimension_semantics<parallel>, #tpu.dimension_semantics<arbitrary>], iteration_bounds = array<i64: 2, 2>, scalar_prefetch = 0 : i64, scratch_operands = 1 : i64, tpu.core_type = #tpu.core_type<tc>, window_params = [{transform_indices = @transform_0, window_bounds = array<i64: 1, 8, 32>}, {transform_indices = @transform_1, window_bounds = array<i64: 1, 1, 1, 8>}, {pipeline_mode = #tpu.pipeline_mode<synchronous>, transform_indices = @transform_2, window_bounds = array<i64: 2, 32, 48>}, {pipeline_mode = #tpu.pipeline_mode<synchronous>, transform_indices = @transform_3, window_bounds = array<i64: 2, 1, 16>}, {pipeline_mode = #tpu.pipeline_mode<synchronous>, transform_indices = @transform_4, window_bounds = array<i64: 2, 1, 16>}, {pipeline_mode = #tpu.pipeline_mode<synchronous>, transform_indices = @transform_5, window_bounds = array<i64: 2, 16, 32>}, {pipeline_mode = #tpu.pipeline_mode<synchronous>, transform_indices = @transform_6, window_bounds = array<i64: 1, 32>}, {transform_indices = @transform_7, window_bounds = array<i64: 1, 8, 32>}]} {
    %c0 = arith.constant 0 : index
    %c0_0 = arith.constant 0 : index
    %c0_1 = arith.constant 0 : index
    %0 = vector.load %arg2[%c0, %c0_0, %c0_1] : memref<1x8x32xf32, #tpu.memory_space<vmem>>, vector<1x8x32xf32>
    %1 = vector.shape_cast %0 : vector<1x8x32xf32> to vector<8x32xf32>
    %2 = arith.index_cast %arg1 : i32 to index
    %c0_2 = arith.constant 0 : index
    %c0_3 = arith.constant 0 : index
    %3 = vector.load %arg4[%2, %c0_2, %c0_3] : memref<2x32x48xf32, #tpu.memory_space<vmem>>, vector<1x32x48xf32>
    %4 = vector.shape_cast %3 : vector<1x32x48xf32> to vector<32x48xf32>
    %cst = arith.constant dense<0.000000e+00> : vector<8x48xf32>
    %5 = tpu.matmul %1, %4, %cst {dimension_numbers = #tpu.dot_dimension_numbers<[1], [0], [0], [1], [0, 0, 1, 1], [], []>} : vector<8x32xf32>, vector<32x48xf32>, vector<8x48xf32> -> vector<8x48xf32>
    %6 = vector.extract_strided_slice %5 {offsets = [0, 0], sizes = [8, 16], strides = [1, 1]} : vector<8x48xf32> to vector<8x16xf32>
    %7 = arith.index_cast %arg1 : i32 to index
    %c0_4 = arith.constant 0 : index
    %c0_5 = arith.constant 0 : index
    %8 = vector.load %arg5[%7, %c0_4, %c0_5] : memref<2x1x16xf32, #tpu.memory_space<vmem>>, vector<1x1x16xf32>
    %9 = vector.shape_cast %8 : vector<1x1x16xf32> to vector<1x16xf32>
    %10 = vector.broadcast %9 : vector<1x16xf32> to vector<8x16xf32>
    %11 = arith.addf %6, %10 : vector<8x16xf32>
    %12 = vector.extract_strided_slice %5 {offsets = [0, 16], sizes = [8, 16], strides = [1, 1]} : vector<8x48xf32> to vector<8x16xf32>
    %13 = vector.extract_strided_slice %5 {offsets = [0, 32], sizes = [8, 16], strides = [1, 1]} : vector<8x48xf32> to vector<8x16xf32>
    %14 = arith.index_cast %arg1 : i32 to index
    %c0_6 = arith.constant 0 : index
    %c0_7 = arith.constant 0 : index
    %15 = vector.load %arg6[%14, %c0_6, %c0_7] : memref<2x1x16xf32, #tpu.memory_space<vmem>>, vector<1x1x16xf32>
    %16 = vector.shape_cast %15 : vector<1x1x16xf32> to vector<1x16xf32>
    %17 = vector.broadcast %16 : vector<1x16xf32> to vector<8x16xf32>
    %18 = arith.addf %13, %17 : vector<8x16xf32>
    %c0_8 = arith.constant 0 : index
    %c0_9 = arith.constant 0 : index
    %c0_10 = arith.constant 0 : index
    %c0_11 = arith.constant 0 : index
    %19 = vector.load %arg3[%c0_8, %c0_9, %c0_10, %c0_11] : memref<1x1x1x8xf32, #tpu.memory_space<vmem>>, vector<1x1x1x8xf32>
    %20 = vector.shape_cast %19 : vector<1x1x1x8xf32> to vector<1x8xf32>
    %21 = vector.extract_strided_slice %11 {offsets = [0, 0], sizes = [8, 8], strides = [1, 1]} : vector<8x16xf32> to vector<8x8xf32>
    %22 = vector.extract_strided_slice %12 {offsets = [0, 0], sizes = [8, 8], strides = [1, 1]} : vector<8x16xf32> to vector<8x8xf32>
    %23 = vector.extract_strided_slice %18 {offsets = [0, 0], sizes = [8, 8], strides = [1, 1]} : vector<8x16xf32> to vector<8x8xf32>
    %cst_12 = arith.constant dense<0.000000e+00> : vector<8x8xf32>
    %24 = tpu.matmul %21, %22, %cst_12 {dimension_numbers = #tpu.dot_dimension_numbers<[1], [1], [0], [0], [0, 0, 1, 0], [], []>} : vector<8x8xf32>, vector<8x8xf32>, vector<8x8xf32> -> vector<8x8xf32>
    %25 = vector.broadcast %20 : vector<1x8xf32> to vector<8x8xf32>
    %26 = arith.addf %24, %25 : vector<8x8xf32>
    %cst_13 = arith.constant dense<0xFF800000> : vector<8xf32>
    %27 = vector.multi_reduction <maximumf>, %26, %cst_13 [1] : vector<8x8xf32> to vector<8xf32>
    %28 = vector.shape_cast %27 : vector<8xf32> to vector<8x1xf32>
    %29 = vector.broadcast %28 : vector<8x1xf32> to vector<8x8xf32>
    %30 = arith.subf %26, %29 : vector<8x8xf32>
    %31 = math.exp %30 : vector<8x8xf32>
    %cst_14 = arith.constant dense<0.000000e+00> : vector<8xf32>
    %32 = vector.multi_reduction <add>, %31, %cst_14 [1] : vector<8x8xf32> to vector<8xf32>
    %33 = vector.shape_cast %32 : vector<8xf32> to vector<8x1xf32>
    %cst_15 = arith.constant dense<0.000000e+00> : vector<8x8xf32>
    %34 = tpu.matmul %31, %23, %cst_15 {dimension_numbers = #tpu.dot_dimension_numbers<[1], [0], [0], [1], [0, 0, 1, 1], [], []>} : vector<8x8xf32>, vector<8x8xf32>, vector<8x8xf32> -> vector<8x8xf32>
    %35 = vector.broadcast %33 : vector<8x1xf32> to vector<8x8xf32>
    %36 = arith.divf %34, %35 : vector<8x8xf32>
    %37 = vector.extract_strided_slice %11 {offsets = [0, 8], sizes = [8, 8], strides = [1, 1]} : vector<8x16xf32> to vector<8x8xf32>
    %38 = vector.extract_strided_slice %12 {offsets = [0, 8], sizes = [8, 8], strides = [1, 1]} : vector<8x16xf32> to vector<8x8xf32>
    %39 = vector.extract_strided_slice %18 {offsets = [0, 8], sizes = [8, 8], strides = [1, 1]} : vector<8x16xf32> to vector<8x8xf32>
    %cst_16 = arith.constant dense<0.000000e+00> : vector<8x8xf32>
    %40 = tpu.matmul %37, %38, %cst_16 {dimension_numbers = #tpu.dot_dimension_numbers<[1], [1], [0], [0], [0, 0, 1, 0], [], []>} : vector<8x8xf32>, vector<8x8xf32>, vector<8x8xf32> -> vector<8x8xf32>
    %41 = vector.broadcast %20 : vector<1x8xf32> to vector<8x8xf32>
    %42 = arith.addf %40, %41 : vector<8x8xf32>
    %cst_17 = arith.constant dense<0xFF800000> : vector<8xf32>
    %43 = vector.multi_reduction <maximumf>, %42, %cst_17 [1] : vector<8x8xf32> to vector<8xf32>
    %44 = vector.shape_cast %43 : vector<8xf32> to vector<8x1xf32>
    %45 = vector.broadcast %44 : vector<8x1xf32> to vector<8x8xf32>
    %46 = arith.subf %42, %45 : vector<8x8xf32>
    %47 = math.exp %46 : vector<8x8xf32>
    %cst_18 = arith.constant dense<0.000000e+00> : vector<8xf32>
    %48 = vector.multi_reduction <add>, %47, %cst_18 [1] : vector<8x8xf32> to vector<8xf32>
    %49 = vector.shape_cast %48 : vector<8xf32> to vector<8x1xf32>
    %cst_19 = arith.constant dense<0.000000e+00> : vector<8x8xf32>
    %50 = tpu.matmul %47, %39, %cst_19 {dimension_numbers = #tpu.dot_dimension_numbers<[1], [0], [0], [1], [0, 0, 1, 1], [], []>} : vector<8x8xf32>, vector<8x8xf32>, vector<8x8xf32> -> vector<8x8xf32>
    %51 = vector.broadcast %49 : vector<8x1xf32> to vector<8x8xf32>
    %52 = arith.divf %50, %51 : vector<8x8xf32>
    %53 = tpu.concatenate %36, %52 in 1 : vector<8x8xf32>, vector<8x8xf32> -> vector<8x16xf32>
    %54 = arith.index_cast %arg1 : i32 to index
    %c0_20 = arith.constant 0 : index
    %c0_21 = arith.constant 0 : index
    %55 = vector.load %arg7[%54, %c0_20, %c0_21] : memref<2x16x32xf32, #tpu.memory_space<vmem>>, vector<1x16x32xf32>
    %56 = vector.shape_cast %55 : vector<1x16x32xf32> to vector<16x32xf32>
    %cst_22 = arith.constant dense<0.000000e+00> : vector<8x32xf32>
    %57 = tpu.matmul %53, %56, %cst_22 {dimension_numbers = #tpu.dot_dimension_numbers<[1], [0], [0], [1], [0, 0, 1, 1], [], []>} : vector<8x16xf32>, vector<16x32xf32>, vector<8x32xf32> -> vector<8x32xf32>
    %c0_i32 = arith.constant 0 : i32
    %58 = arith.cmpi eq, %arg1, %c0_i32 : i32
    %59 = arith.extui %58 : i1 to i32
    %c0_i32_23 = arith.constant 0 : i32
    %60 = arith.cmpi ne, %59, %c0_i32_23 : i32
    scf.if %60 {
      %c0_27 = arith.constant 0 : index
      %c0_28 = arith.constant 0 : index
      %67 = vector.load %arg10[%c0_27, %c0_28] : memref<8x32xf32, #tpu.memory_space<vmem>>, vector<8x32xf32>
      tpu.vector_store %arg10[%c0_27, %c0_28], %57 {strides = array<i32>} : memref<8x32xf32, #tpu.memory_space<vmem>>, vector<8x32xf32>,
    } else {
    }
    %c0_i32_24 = arith.constant 0 : i32
    %61 = arith.cmpi sgt, %arg1, %c0_i32_24 : i32
    %62 = arith.extui %61 : i1 to i32
    %c0_i32_25 = arith.constant 0 : i32
    %63 = arith.cmpi ne, %62, %c0_i32_25 : i32
    scf.if %63 {
      %c0_27 = arith.constant 0 : index
      %c0_28 = arith.constant 0 : index
      %67 = vector.load %arg10[%c0_27, %c0_28] : memref<8x32xf32, #tpu.memory_space<vmem>>, vector<8x32xf32>
      %68 = arith.addf %67, %57 : vector<8x32xf32>
      %c0_29 = arith.constant 0 : index
      %c0_30 = arith.constant 0 : index
      %69 = vector.load %arg10[%c0_29, %c0_30] : memref<8x32xf32, #tpu.memory_space<vmem>>, vector<8x32xf32>
      tpu.vector_store %arg10[%c0_29, %c0_30], %68 {strides = array<i32>} : memref<8x32xf32, #tpu.memory_space<vmem>>, vector<8x32xf32>,
    } else {
    }
    %c1_i32 = arith.constant 1 : i32
    %64 = arith.cmpi eq, %arg1, %c1_i32 : i32
    %65 = arith.extui %64 : i1 to i32
    %c0_i32_26 = arith.constant 0 : i32
    %66 = arith.cmpi ne, %65, %c0_i32_26 : i32
    scf.if %66 {
      %c0_27 = arith.constant 0 : index
      %c0_28 = arith.constant 0 : index
      %67 = vector.load %arg10[%c0_27, %c0_28] : memref<8x32xf32, #tpu.memory_space<vmem>>, vector<8x32xf32>
      %c0_29 = arith.constant 0 : index
      %c0_30 = arith.constant 0 : index
      %68 = vector.load %arg8[%c0_29, %c0_30] : memref<1x32xf32, #tpu.memory_space<vmem>>, vector<1x32xf32>
      %69 = vector.broadcast %68 : vector<1x32xf32> to vector<8x32xf32>
      %70 = arith.addf %67, %69 : vector<8x32xf32>
      %c0_31 = arith.constant 0 : index
      %c0_32 = arith.constant 0 : index
      %c0_33 = arith.constant 0 : index
      %71 = vector.load %arg9[%c0_31, %c0_32, %c0_33] : memref<1x8x32xf32, #tpu.memory_space<vmem>>, vector<1x8x32xf32>
      %72 = vector.shape_cast %71 : vector<1x8x32xf32> to vector<8x32xf32>
      %73 = vector.shape_cast %70 : vector<8x32xf32> to vector<1x8x32xf32>
      tpu.vector_store %arg9[%c0_31, %c0_32, %c0_33], %73 {strides = array<i32>} : memref<1x8x32xf32, #tpu.memory_space<vmem>>, vector<1x8x32xf32>,
    } else {
    }
    return
  }
  func.func @transform_0(%arg0: i32, %arg1: i32) -> (i32, i32, i32) {
    %c0_i32 = arith.constant 0 : i32
    %c0_i32_0 = arith.constant 0 : i32
    %c0_i32_1 = arith.constant 0 : i32
    return %arg0, %c0_i32, %c0_i32_0 : i32, i32, i32
  }
  func.func @transform_1(%arg0: i32, %arg1: i32) -> (i32, i32, i32, i32) {
    %c0_i32 = arith.constant 0 : i32
    %c0_i32_0 = arith.constant 0 : i32
    %c0_i32_1 = arith.constant 0 : i32
    %c0_i32_2 = arith.constant 0 : i32
    return %arg0, %c0_i32, %c0_i32_0, %c0_i32_1 : i32, i32, i32, i32
  }
  func.func @transform_2(%arg0: i32, %arg1: i32) -> (i32, i32, i32) {
    %c0_i32 = arith.constant 0 : i32
    %c0_i32_0 = arith.constant 0 : i32
    %c0_i32_1 = arith.constant 0 : i32
    %c0_i32_2 = arith.constant 0 : i32
    return %c0_i32, %c0_i32_0, %c0_i32_1 : i32, i32, i32
  }
  func.func @transform_3(%arg0: i32, %arg1: i32) -> (i32, i32, i32) {
    %c0_i32 = arith.constant 0 : i32
    %c0_i32_0 = arith.constant 0 : i32
    %c0_i32_1 = arith.constant 0 : i32
    %c0_i32_2 = arith.constant 0 : i32
    return %c0_i32, %c0_i32_0, %c0_i32_1 : i32, i32, i32
  }
  func.func @transform_4(%arg0: i32, %arg1: i32) -> (i32, i32, i32) {
    %c0_i32 = arith.constant 0 : i32
    %c0_i32_0 = arith.constant 0 : i32
    %c0_i32_1 = arith.constant 0 : i32
    %c0_i32_2 = arith.constant 0 : i32
    return %c0_i32, %c0_i32_0, %c0_i32_1 : i32, i32, i32
  }
  func.func @transform_5(%arg0: i32, %arg1: i32) -> (i32, i32, i32) {
    %c0_i32 = arith.constant 0 : i32
    %c0_i32_0 = arith.constant 0 : i32
    %c0_i32_1 = arith.constant 0 : i32
    %c0_i32_2 = arith.constant 0 : i32
    return %c0_i32, %c0_i32_0, %c0_i32_1 : i32, i32, i32
  }
  func.func @transform_6(%arg0: i32, %arg1: i32) -> (i32, i32) {
    %c0_i32 = arith.constant 0 : i32
    %c0_i32_0 = arith.constant 0 : i32
    %c0_i32_1 = arith.constant 0 : i32
    return %c0_i32, %c0_i32_0 : i32, i32
  }
  func.func @transform_7(%arg0: i32, %arg1: i32) -> (i32, i32, i32) {
    %c0_i32 = arith.constant 0 : i32
    %c0_i32_0 = arith.constant 0 : i32
    %c0_i32_1 = arith.constant 0 : i32
    return %arg0, %c0_i32, %c0_i32_0 : i32, i32, i32
  }
}

</mosaic_0001>

<llo_original>
// kernel: tpu_custom_call.1
$region0: #{tpu_custom_call.1}
  #allocation0 [shape = 'u32[]', space=smem, size = 0x4, offset = 0x4, fixed_abs, tag = 'smem constant byte address 0x4 - core index']
  #allocation1 [shape = 'u32[72,128]{1,0:T(1,128)}', space=vmem, size = 0x9000, scoped, tag = 'internal scratch']
  #allocation2 [shape = 'f32[8,32]{1,0:T(8,128)}', space=vmem, size = 0x1000, scoped, tag = 'scratch operand']
  %s0 = inlined_call_operand.hbm [shape: f32[2,8,32], index: 0, kind: input, shape index: {}]
  %s1 = inlined_call_operand.hbm [shape: f32[2,1,1,8], index: 1, kind: input, shape index: {}]
  %s2 = inlined_call_operand.hbm [shape: f32[2,32,48], index: 2, kind: input, shape index: {}]
  %s3 = inlined_call_operand.vmem [shape: f32[2,1,16], index: 3, kind: input, shape index: {}]
  %s4 = inlined_call_operand.hbm [shape: f32[2,1,16], index: 4, kind: input, shape index: {}]
  %s5 = inlined_call_operand.hbm [shape: f32[2,16,32], index: 5, kind: input, shape index: {}]
  %s6 = inlined_call_operand.vmem [shape: f32[1,32], index: 6, kind: input, shape index: {}]
  %s7 = inlined_call_operand.hbm [shape: f32[2,8,32], index: 7, kind: output, shape index: {}]
  %s8 = sld [smem:[#allocation0]]
  $region93: #{tpu_custom_call.1} parent=0
    _
  %s10 = ssub.s32 1, %s8
  %s11 = scalar_select 0, %s10, %s8
  $region1: #{tpu_custom_call.1} parent=0
    #allocation3 [shape = 'u8[8192]{0}', space=vmem, size = 0x2000, scoped, tag = 'input window, operand 0']
    #allocation4 [shape = 's32[2]{0}', space=sflag, size = 0x8, scoped, tag = 'scoped memory for tpu_custom_call.1']
    #allocation5 [shape = 's32[2]{0}', space=sflag, size = 0x8, scoped, tag = 'scoped memory for tpu_custom_call.1']
    #allocation6 [shape = 'u8[1024]{0}', space=vmem, size = 0x400, scoped, tag = 'input window, operand 1']
    #allocation7 [shape = 's32[2]{0}', space=sflag, size = 0x8, scoped, tag = 'scoped memory for tpu_custom_call.1']
    #allocation8 [shape = 'u8[32768]{0}', space=vmem, size = 0x8000, scoped, tag = 'input window, operand 2, single buffered']
    #allocation9 [shape = 'u8[1024]{0}', space=vmem, size = 0x400, scoped, tag = 'input window, operand 4, single buffered']
    #allocation10 [shape = 's32[1]{0}', space=sflag, size = 0x4, scoped, tag = 'scoped memory for tpu_custom_call.1']
    #allocation11 [shape = 'u8[16384]{0}', space=vmem, size = 0x4000, scoped, tag = 'input window, operand 5, single buffered']
    #allocation12 [shape = 'u8[8192]{0}', space=vmem, size = 0x2000, scoped, tag = 'output window, operand 0']
    %12 = vsyncpa [#allocation4], 0
    %s13 = scalar_lea.sflag [#allocation4], 1
    %14 = vsyncpa %s13, 0
    %15 = vsyncpa [#allocation7], 0
    %s16 = scalar_lea.sflag [#allocation7], 1
    %17 = vsyncpa %s16, 0
    %18 = vsyncpa [#allocation10], 0
    %19 = vsyncpa [#allocation5], 0
    %s20 = scalar_lea.sflag [#allocation5], 1
    %21 = vsyncpa %s20, 0
    loop: start=0, step=1, limit=6
    $region2: #{tpu_custom_call.1} parent=1 // loop_pre_header
      _
    $region3: #{tpu_custom_call.1} parent=1 // loop_header
      %s23 = sphi 0, %s27
      %p24 = scmp.ge.s32.totalorder %s23, 6
      %s30 = sphi 0, %s42
      %s31 = sphi 0, %s38
      %s32 = sphi 0, %s30
      %s33 = sphi 0, %s31
      %s34 = sphi 0, %s32
      %s35 = sphi 0, %s33
      %s45 = sphi 0, %s47
      %s48 = sphi 0, %s45
      %s49 = sphi 0, %s48
      %s65 = sphi 0, %s49
      %s71 = sphi 0, %s73
      %s74 = sphi 0, %s71
      %s75 = sphi 0, %s74
      %s91 = sphi 0, %s75
      %s95 = sphi 0, %s95
      %s97 = sphi 0, %s95
      %s98 = sphi 0, %s97
      %s112 = sphi 0, %s98
      %s116 = sphi 0, %s116
      %s118 = sphi 0, %s116
      %s119 = sphi 0, %s118
      %s133 = sphi 0, %s119
      %s137 = sphi 0, %s137
      %s139 = sphi 0, %s137
      %s140 = sphi 0, %s139
      %s154 = sphi 0, %s140
      %s158 = sphi 0, %s158
      %s160 = sphi 0, %s158
      %s161 = sphi 0, %s160
      %s175 = sphi 0, %s161
      %s179 = sphi 0, %s179
      %s181 = sphi 0, %s179
      %s182 = sphi 0, %s181
      %s196 = sphi 0, %s182
      %s202 = sphi 0, %s204
      %s205 = sphi 0, %s202
      %s206 = sphi 0, %s205
      %s222 = sphi 0, %s206
    $region4: #{tpu_custom_call.1} parent=1 // loop_header_branch
      %26 = sbr.rel (%p24) target = $region8
    $region5: #{tpu_custom_call.1} parent=1 // loop_body
      %s28 = ssub.s32 %s23, 1
      %s29 = ssub.s32 %s23, 2
      %s36 = sadd.s32 1, %s31
      %p37 = scmp.ge.s32.totalorder %s36, 2
      %s38 = scalar_select %p37, 0, %s36
      %s39 = sadd.s32 1, %s30
      %s40 = scalar_select %p37, %s39, %s30
      %p41 = scmp.ge.s32.totalorder %s40, 2
      %s42 = scalar_select %p41, 0, %s40
      %s43 = ssub.s32 %s30, %s42
      %p44 = scmp.eq.s32.totalorder %s43, 0
      %s46 = sadd.s32 %s45, 1
      %s47 = scalar_select %p44, %s45, %s46
      %p50 = pneg %p44
      %p51 = scmp.eq.s32.totalorder %s23, 3
      %p52 = por %p50, %p51
      %p53 = scmp.ne.s32.totalorder %s45, %s48
      %p54 = scmp.eq.s32.totalorder %s23, 0
      %p55 = por %p53, %p54
      %p56 = scmp.ne.s32.totalorder %s45, %s48
      %p57 = scmp.eq.s32.totalorder %s28, 3
      %p58 = por %p56, %p57
      %p59 = scmp.ne.s32.totalorder %s48, %s49
      %p60 = scmp.eq.s32.totalorder %s28, 0
      %p61 = por %p59, %p60
      %p62 = scmp.ne.s32.totalorder %s48, %s49
      %p63 = scmp.eq.s32.totalorder %s29, 3
      %p64 = por %p62, %p63
      %p66 = scmp.ne.s32.totalorder %s49, %s65
      %p67 = scmp.eq.s32.totalorder %s29, 0
      %p68 = por %p66, %p67
      %s69 = ssub.s32 %s30, %s42
      %p70 = scmp.eq.s32.totalorder %s69, 0
      %s72 = sadd.s32 %s71, 1
      %s73 = scalar_select %p70, %s71, %s72
      %p76 = pneg %p70
      %p77 = scmp.eq.s32.totalorder %s23, 3
      %p78 = por %p76, %p77
      %p79 = scmp.ne.s32.totalorder %s71, %s74
      %p80 = scmp.eq.s32.totalorder %s23, 0
      %p81 = por %p79, %p80
      %p82 = scmp.ne.s32.totalorder %s71, %s74
      %p83 = scmp.eq.s32.totalorder %s28, 3
      %p84 = por %p82, %p83
      %p85 = scmp.ne.s32.totalorder %s74, %s75
      %p86 = scmp.eq.s32.totalorder %s28, 0
      %p87 = por %p85, %p86
      %p88 = scmp.ne.s32.totalorder %s74, %s75
      %p89 = scmp.eq.s32.totalorder %s29, 3
      %p90 = por %p88, %p89
      %p92 = scmp.ne.s32.totalorder %s75, %s91
      %p93 = scmp.eq.s32.totalorder %s29, 0
      %p94 = por %p92, %p93
      %s96 = sadd.s32 %s95, 1
      %p99 = scmp.eq.s32.totalorder %s23, 3
      %p100 = scmp.ne.s32.totalorder %s95, %s97
      %p101 = scmp.eq.s32.totalorder %s23, 0
      %p102 = por %p100, %p101
      %p103 = scmp.ne.s32.totalorder %s95, %s97
      %p104 = scmp.eq.s32.totalorder %s28, 3
      %p105 = por %p103, %p104
      %p106 = scmp.ne.s32.totalorder %s97, %s98
      %p107 = scmp.eq.s32.totalorder %s28, 0
      %p108 = por %p106, %p107
      %p109 = scmp.ne.s32.totalorder %s97, %s98
      %p110 = scmp.eq.s32.totalorder %s29, 3
      %p111 = por %p109, %p110
      %p113 = scmp.ne.s32.totalorder %s98, %s112
      %p114 = scmp.eq.s32.totalorder %s29, 0
      %p115 = por %p113, %p114
      %s117 = sadd.s32 %s116, 1
      %p120 = scmp.eq.s32.totalorder %s23, 3
      %p121 = scmp.ne.s32.totalorder %s116, %s118
      %p122 = scmp.eq.s32.totalorder %s23, 0
      %p123 = por %p121, %p122
      %p124 = scmp.ne.s32.totalorder %s116, %s118
      %p125 = scmp.eq.s32.totalorder %s28, 3
      %p126 = por %p124, %p125
      %p127 = scmp.ne.s32.totalorder %s118, %s119
      %p128 = scmp.eq.s32.totalorder %s28, 0
      %p129 = por %p127, %p128
      %p130 = scmp.ne.s32.totalorder %s118, %s119
      %p131 = scmp.eq.s32.totalorder %s29, 3
      %p132 = por %p130, %p131
      %p134 = scmp.ne.s32.totalorder %s119, %s133
      %p135 = scmp.eq.s32.totalorder %s29, 0
      %p136 = por %p134, %p135
      %s138 = sadd.s32 %s137, 1
      %p141 = scmp.eq.s32.totalorder %s23, 3
      %p142 = scmp.ne.s32.totalorder %s137, %s139
      %p143 = scmp.eq.s32.totalorder %s23, 0
      %p144 = por %p142, %p143
      %p145 = scmp.ne.s32.totalorder %s137, %s139
      %p146 = scmp.eq.s32.totalorder %s28, 3
      %p147 = por %p145, %p146
      %p148 = scmp.ne.s32.totalorder %s139, %s140
      %p149 = scmp.eq.s32.totalorder %s28, 0
      %p150 = por %p148, %p149
      %p151 = scmp.ne.s32.totalorder %s139, %s140
      %p152 = scmp.eq.s32.totalorder %s29, 3
      %p153 = por %p151, %p152
      %p155 = scmp.ne.s32.totalorder %s140, %s154
      %p156 = scmp.eq.s32.totalorder %s29, 0
      %p157 = por %p155, %p156
      %s159 = sadd.s32 %s158, 1
      %p162 = scmp.eq.s32.totalorder %s23, 3
      %p163 = scmp.ne.s32.totalorder %s158, %s160
      %p164 = scmp.eq.s32.totalorder %s23, 0
      %p165 = por %p163, %p164
      %p166 = scmp.ne.s32.totalorder %s158, %s160
      %p167 = scmp.eq.s32.totalorder %s28, 3
      %p168 = por %p166, %p167
      %p169 = scmp.ne.s32.totalorder %s160, %s161
      %p170 = scmp.eq.s32.totalorder %s28, 0
      %p171 = por %p169, %p170
      %p172 = scmp.ne.s32.totalorder %s160, %s161
      %p173 = scmp.eq.s32.totalorder %s29, 3
      %p174 = por %p172, %p173
      %p176 = scmp.ne.s32.totalorder %s161, %s175
      %p177 = scmp.eq.s32.totalorder %s29, 0
      %p178 = por %p176, %p177
      %s180 = sadd.s32 %s179, 1
      %p183 = scmp.eq.s32.totalorder %s23, 3
      %p184 = scmp.ne.s32.totalorder %s179, %s181
      %p185 = scmp.eq.s32.totalorder %s23, 0
      %p186 = por %p184, %p185
      %p187 = scmp.ne.s32.totalorder %s179, %s181
      %p188 = scmp.eq.s32.totalorder %s28, 3
      %p189 = por %p187, %p188
      %p190 = scmp.ne.s32.totalorder %s181, %s182
      %p191 = scmp.eq.s32.totalorder %s28, 0
      %p192 = por %p190, %p191
      %p193 = scmp.ne.s32.totalorder %s181, %s182
      %p194 = scmp.eq.s32.totalorder %s29, 3
      %p195 = por %p193, %p194
      %p197 = scmp.ne.s32.totalorder %s182, %s196
      %p198 = scmp.eq.s32.totalorder %s29, 0
      %p199 = por %p197, %p198
      %s200 = ssub.s32 %s30, %s42
      %p201 = scmp.eq.s32.totalorder %s200, 0
      %s203 = sadd.s32 %s202, 1
      %s204 = scalar_select %p201, %s202, %s203
      %p207 = pneg %p201
      %p208 = scmp.eq.s32.totalorder %s23, 3
      %p209 = por %p207, %p208
      %p210 = scmp.ne.s32.totalorder %s202, %s205
      %p211 = scmp.eq.s32.totalorder %s23, 0
      %p212 = por %p210, %p211
      %p213 = scmp.ne.s32.totalorder %s202, %s205
      %p214 = scmp.eq.s32.totalorder %s28, 3
      %p215 = por %p213, %p214
      %p216 = scmp.ne.s32.totalorder %s205, %s206
      %p217 = scmp.eq.s32.totalorder %s28, 0
      %p218 = por %p216, %p217
      %p219 = scmp.ne.s32.totalorder %s205, %s206
      %p220 = scmp.eq.s32.totalorder %s29, 3
      %p221 = por %p219, %p220
      %p223 = scmp.ne.s32.totalorder %s206, %s222
      %p224 = scmp.eq.s32.totalorder %s29, 0
      %p225 = por %p223, %p224
      %p226 = scmp.le.s32.totalorder 1, %s23
      %p227 = scmp.lt.s32.totalorder %s23, 5
      %p228 = pnand %p226, %p227
      %p229 = pneg %p228
      // Predicated region
      $region9: #{tpu_custom_call.1} parent=5 // pred_check
        _
      $region10: #{tpu_custom_call.1} parent=5 // pred_check_branch
        %231 = sbr.rel (%p228) target = $region12
      $region11: #{tpu_custom_call.1} parent=5 // pred_region
        %s232 = ssub.s32 %s23, 1
        // Predicated region
        $region13: #{tpu_custom_call.1} parent=11 // pred_check
          %p233 = pneg %p108
        $region14: #{tpu_custom_call.1} parent=11 // pred_check_branch
          %235 = sbr.rel (%p233) target = $region16
        $region15: #{tpu_custom_call.1} parent=11 // pred_region
          %237 = vsyncadd [#allocation7], 0
          %s238 = sshll.u32 %s2, 4
          %s239 = int_to_ptr.hbm [resolvable:$true] %s238
          %s240 = sshll.u32 [#allocation8], 4
          %s241 = int_to_ptr.vmem [resolvable:$true] %s240
          %246 = dma.hbm_to_vmem [thread:$0]  %s239, 1024, %s241, [#allocation7], 128, 128, 8
        $region16: #{tpu_custom_call.1} parent=11 // pred_fallthru
          _
        // Predicated region
        $region17: #{tpu_custom_call.1} parent=11 // pred_check
          %p247 = pneg %p129
        $region18: #{tpu_custom_call.1} parent=11 // pred_check_branch
          %249 = sbr.rel (%p247) target = $region20
        $region19: #{tpu_custom_call.1} parent=11 // pred_region
          _
        $region20: #{tpu_custom_call.1} parent=11 // pred_fallthru
          _
        // Predicated region
        $region21: #{tpu_custom_call.1} parent=11 // pred_check
          %p250 = pneg %p150
        $region22: #{tpu_custom_call.1} parent=11 // pred_check_branch
          %252 = sbr.rel (%p250) target = $region24
        $region23: #{tpu_custom_call.1} parent=11 // pred_region
          %254 = vsyncadd [#allocation10], 0
          %s255 = sshll.u32 %s4, 4
          %s256 = int_to_ptr.hbm [resolvable:$true] %s255
          %s257 = sshll.u32 [#allocation9], 4
          %s258 = int_to_ptr.vmem [resolvable:$true] %s257
          %263 = dma.hbm_to_vmem [thread:$0]  %s256, 32, %s258, [#allocation10], 16, 16, 1
        $region24: #{tpu_custom_call.1} parent=11 // pred_fallthru
          _
        // Predicated region
        $region25: #{tpu_custom_call.1} parent=11 // pred_check
          %p264 = pneg %p171
        $region26: #{tpu_custom_call.1} parent=11 // pred_check_branch
          %266 = sbr.rel (%p264) target = $region28
        $region27: #{tpu_custom_call.1} parent=11 // pred_region
          %268 = vsyncadd [#allocation10], 0
          %s269 = sshll.u32 %s5, 4
          %s270 = int_to_ptr.hbm [resolvable:$true] %s269
          %s271 = sshll.u32 [#allocation11], 4
          %s272 = int_to_ptr.vmem [resolvable:$true] %s271
          %277 = dma.hbm_to_vmem [thread:$0]  %s270, 512, %s272, [#allocation10], 128, 128, 8
        $region28: #{tpu_custom_call.1} parent=11 // pred_fallthru
          _
        // Predicated region
        $region29: #{tpu_custom_call.1} parent=11 // pred_check
          %p278 = pneg %p192
        $region30: #{tpu_custom_call.1} parent=11 // pred_check_branch
          %280 = sbr.rel (%p278) target = $region32
        $region31: #{tpu_custom_call.1} parent=11 // pred_region
          _
        $region32: #{tpu_custom_call.1} parent=11 // pred_fallthru
          _
      $region12: #{tpu_custom_call.1} parent=5 // pred_fallthru
        _
      %p281 = scmp.lt.s32.totalorder %s23, 4
      // Predicated region
      $region33: #{tpu_custom_call.1} parent=5 // pred_check
        %p282 = pneg %p281
      $region34: #{tpu_custom_call.1} parent=5 // pred_check_branch
        %284 = sbr.rel (%p282) target = $region36
      $region35: #{tpu_custom_call.1} parent=5 // pred_region
        // Predicated region
        $region37: #{tpu_custom_call.1} parent=35 // pred_check
          %p285 = pneg %p55
        $region38: #{tpu_custom_call.1} parent=35 // pred_check_branch
          %287 = sbr.rel (%p285) target = $region40
        $region39: #{tpu_custom_call.1} parent=35 // pred_region
          %s288 = sand.u32 %s45, 1
          %s289 = scalar_lea.sflag [#allocation4], %s288
          %s290 = sand.u32 %s45, 1
          %s291 = smul.addr %s290, 8
          %s292 = scalar_lea.vmem [#allocation3], %s291
          %294 = vsyncadd %s289, 0
          %s295 = smul.addr %s30, 8
          %s296 = scalar_lea.hbm %s0, %s295
          %s298 = sshll.u32 %s296, 4
          %s299 = int_to_ptr.hbm [resolvable:$true] %s298
          %s300 = sshll.u32 %s292, 4
          %s301 = int_to_ptr.vmem [resolvable:$true] %s300
          %303 = dma.hbm_to_vmem [thread:$0]  %s299, 128, %s301, %s289
        $region40: #{tpu_custom_call.1} parent=35 // pred_fallthru
          _
        // Predicated region
        $region41: #{tpu_custom_call.1} parent=35 // pred_check
          %p304 = pneg %p81
        $region42: #{tpu_custom_call.1} parent=35 // pred_check_branch
          %306 = sbr.rel (%p304) target = $region44
        $region43: #{tpu_custom_call.1} parent=35 // pred_region
          %s307 = sand.u32 %s23, 1
          %s308 = scalar_lea.sflag [#allocation7], %s307
          %s309 = sand.u32 %s71, 1
          %s310 = scalar_lea.vmem [#allocation6], %s309
          %312 = vsyncadd %s308, 0
          %s313 = scalar_lea.hbm %s1, %s30
          %s315 = sshll.u32 %s313, 4
          %s316 = int_to_ptr.hbm [resolvable:$true] %s315
          %s317 = sshll.u32 %s310, 4
          %s318 = int_to_ptr.vmem [resolvable:$true] %s317
          %320 = dma.hbm_to_vmem [thread:$0]  %s316, 16, %s318, %s308
        $region44: #{tpu_custom_call.1} parent=35 // pred_fallthru
          _
      $region36: #{tpu_custom_call.1} parent=5 // pred_fallthru
        _
      %p321 = scmp.le.s32.totalorder 1, %s23
      %p322 = scmp.lt.s32.totalorder %s23, 5
      %p323 = pnand %p321, %p322
      %p324 = pneg %p323
      // Predicated region
      $region45: #{tpu_custom_call.1} parent=5 // pred_check
        _
      $region46: #{tpu_custom_call.1} parent=5 // pred_check_branch
        %326 = sbr.rel (%p323) target = $region48
      $region47: #{tpu_custom_call.1} parent=5 // pred_region
        %s327 = ssub.s32 %s23, 1
        %s328 = sand.u32 %s48, 1
        %s329 = scalar_lea.sflag [#allocation4], %s328
        %s330 = sand.u32 %s48, 1
        %s331 = smul.addr %s330, 8
        %s332 = scalar_lea.vmem [#allocation3], %s331
        // Predicated region
        $region49: #{tpu_custom_call.1} parent=47 // pred_check
          %p333 = pneg %p61
        $region50: #{tpu_custom_call.1} parent=47 // pred_check_branch
          %335 = sbr.rel (%p333) target = $region52
        $region51: #{tpu_custom_call.1} parent=47 // pred_region
          %337 = dma.done %s329, 128
        $region52: #{tpu_custom_call.1} parent=47 // pred_fallthru
          _
        %s338 = sand.u32 %s28, 1
        %s339 = scalar_lea.sflag [#allocation7], %s338
        %s340 = sand.u32 %s74, 1
        %s341 = scalar_lea.vmem [#allocation6], %s340
        // Predicated region
        $region53: #{tpu_custom_call.1} parent=47 // pred_check
          %p342 = pneg %p87
        $region54: #{tpu_custom_call.1} parent=47 // pred_check_branch
          %344 = sbr.rel (%p342) target = $region56
        $region55: #{tpu_custom_call.1} parent=47 // pred_region
          %346 = dma.done %s339, 16
        $region56: #{tpu_custom_call.1} parent=47 // pred_fallthru
          _
        // Predicated region
        $region57: #{tpu_custom_call.1} parent=47 // pred_check
          %p347 = pneg %p108
        $region58: #{tpu_custom_call.1} parent=47 // pred_check_branch
          %349 = sbr.rel (%p347) target = $region60
        $region59: #{tpu_custom_call.1} parent=47 // pred_region
          %351 = dma.done [#allocation7], 1024
        $region60: #{tpu_custom_call.1} parent=47 // pred_fallthru
          _
        // Predicated region
        $region61: #{tpu_custom_call.1} parent=47 // pred_check
          %p352 = pneg %p150
        $region62: #{tpu_custom_call.1} parent=47 // pred_check_branch
          %354 = sbr.rel (%p352) target = $region64
        $region63: #{tpu_custom_call.1} parent=47 // pred_region
          %356 = dma.done [#allocation10], 32
        $region64: #{tpu_custom_call.1} parent=47 // pred_fallthru
          _
        // Predicated region
        $region65: #{tpu_custom_call.1} parent=47 // pred_check
          %p357 = pneg %p171
        $region66: #{tpu_custom_call.1} parent=47 // pred_check_branch
          %359 = sbr.rel (%p357) target = $region68
        $region67: #{tpu_custom_call.1} parent=47 // pred_region
          %361 = dma.done [#allocation10], 512
        $region68: #{tpu_custom_call.1} parent=47 // pred_fallthru
          _
        %s362 = sand.u32 %s48, 1
        %s363 = scalar_lea.sflag [#allocation4], %s362
        %s364 = sand.u32 %s48, 1
        %s365 = smul.addr %s364, 8
        %s366 = scalar_lea.vmem [#allocation3], %s365
        %p367 = pneg %p61
        %p368 = pneg %p58
        %s369 = sand.u32 %s28, 1
        %s370 = scalar_lea.sflag [#allocation7], %s369
        %s371 = sand.u32 %s74, 1
        %s372 = scalar_lea.vmem [#allocation6], %s371
        %p373 = pneg %p87
        %p374 = pneg %p84
        %p375 = pneg %p108
        %p376 = pneg %p105
        %p377 = pneg %p129
        %p378 = pneg %p126
        %p379 = pneg %p150
        %p380 = pneg %p147
        %p381 = pneg %p171
        %p382 = pneg %p168
        %p383 = pneg %p192
        %p384 = pneg %p189
        %p385 = pneg %p218
        %p386 = pneg %p215
        %s387 = sand.u32 %s205, 1
        %s388 = scalar_lea.sflag [#allocation5], %s387
        %s389 = sand.u32 %s205, 1
        %s390 = smul.addr %s389, 8
        %s391 = scalar_lea.vmem [#allocation12], %s390
        %v392 = vld [vmem:[%s332] sm:$0xff]
        %s393 = smul.u32 %s33, 32
        %s394 = scalar_lea.vmem [#allocation8], %s393
        %v395 = vld [vmem:[%s394] sm:$0xff]
        %v396 = vld [vmem:[%s394 + $0x8] sm:$0xff]
        %v397 = vld [vmem:[%s394 + $0x10] sm:$0xff]
        %v398 = vld [vmem:[%s394 + $0x18] sm:$0xff]
        %vm399 = vcmask 261120
        %v401 = vsel %vm399, %v392, 0
        %403 = vmatpush.msra.mxu0 0.0
        %404 = vmatpush.msra.mxu0 0.0
        %405 = vmatpush.msra.mxu0 0.0
        %406 = vmatpush.msra.mxu0 0.0
        %407 = vmatpush.msra.mxu0 0.0
        %408 = vmatpush.msra.mxu0 0.0
        %409 = vmatpush.msra.mxu0 0.0
        %410 = vmatpush.msra.mxu0 0.0
        %411 = vmatpush.msra.mxu0 0.0
        %412 = vmatpush.msra.mxu0 0.0
        %413 = vmatpush.msra.mxu0 0.0
        %414 = vmatpush.msra.mxu0 0.0
        %415 = vmatpush.msra.mxu0 %v398
        %416 = vmatpush.msra.mxu0 %v397
        %417 = vmatpush.msra.mxu0 %v396
        %418 = vmatpush.msra.mxu0 %v395
        %419 = vmatmul.f32.gmra.mxu0 %v401
        %v420 = vpop.f32.mrf.mxu0
        %v421 = vadd.f32 0.0, %v420
        %422 = vdwg.mxu0
        %s423 = scalar_lea.vmem %s3, %s33
        %v424 = vld [vmem:[%s423] sm:$0x1]
        %v426 = vperm.slane %v424, 0
        %v428 = vadd.f32 %v421, %v426
        %s429 = scalar_lea.vmem [#allocation9], %s33
        %v430 = vld [vmem:[%s429] sm:$0x1]
        %v432 = vperm.slane %v430, 0
        %433 = vrot.lane.b32.xlu0 %v432, 32
        %v434 = vpop.permute.xlu0 %433
        %v436 = vadd.f32 %v421, %v434
        %v437 = vld [vmem:[%s341] sm:$0x1]
        %v439 = vperm.slane %v437, 0
        %442 = vrot.lane.b32.xlu0 %v421, 112
        %v443 = vpop.permute.xlu0 %442
        %vm444 = vcmask 64512
        %v446 = vsel %vm444, %v428, 0
        %v448 = vsel %vm444, %v443, 0
        %450 = vmatpush.xpose.msra.mxu0 0.0
        %451 = vmatpush.xpose.msra.mxu0 0.0
        %452 = vmatpush.xpose.msra.mxu0 0.0
        %453 = vmatpush.xpose.msra.mxu0 0.0
        %454 = vmatpush.xpose.msra.mxu0 0.0
        %455 = vmatpush.xpose.msra.mxu0 0.0
        %456 = vmatpush.xpose.msra.mxu0 0.0
        %457 = vmatpush.xpose.msra.mxu0 0.0
        %458 = vmatpush.xpose.msra.mxu0 0.0
        %459 = vmatpush.xpose.msra.mxu0 0.0
        %460 = vmatpush.xpose.msra.mxu0 0.0
        %461 = vmatpush.xpose.msra.mxu0 0.0
        %462 = vmatpush.xpose.msra.mxu0 0.0
        %463 = vmatpush.xpose.msra.mxu0 0.0
        %464 = vmatpush.xpose.msra.mxu0 0.0
        %465 = vmatpush.xpose.msra.mxu0 %v448
        %466 = vmatmul.f32.gmra.mxu0 %v446
        %v467 = vpop.f32.mrf.mxu0
        %v468 = vadd.f32 %v439, %v467
        %469 = vdwg.mxu0
        %v470 = vsel %vm444, %v468, -inf
        %471 = vmax.xlane.f32.xlu0 %v470
        %v472 = vpop.xlane.xlu0 %471
        %v473 = vsub.f32 %v468, %v472
        %v474 = vmul.f32 %v473, 1.442695
        %v475 = vpow.pop %v474
        %v476 = vsel %vm444, %v475, 0.0
        %477 = vadd.xlane.f32.xlu0 %v476
        %v478 = vpop.xlane.xlu0 %477
        %480 = vrot.lane.b32.xlu0 %v436, 96
        %v481 = vpop.permute.xlu0 %480
        %v484 = vsel %vm444, %v475, 0
        %486 = vmatpush.msra.mxu0 0.0
        %487 = vmatpush.msra.mxu0 0.0
        %488 = vmatpush.msra.mxu0 0.0
        %489 = vmatpush.msra.mxu0 0.0
        %490 = vmatpush.msra.mxu0 0.0
        %491 = vmatpush.msra.mxu0 0.0
        %492 = vmatpush.msra.mxu0 0.0
        %493 = vmatpush.msra.mxu0 0.0
        %494 = vmatpush.msra.mxu0 0.0
        %495 = vmatpush.msra.mxu0 0.0
        %496 = vmatpush.msra.mxu0 0.0
        %497 = vmatpush.msra.mxu0 0.0
        %498 = vmatpush.msra.mxu0 0.0
        %499 = vmatpush.msra.mxu0 0.0
        %500 = vmatpush.msra.mxu0 0.0
        %501 = vmatpush.msra.mxu0 %v481
        %502 = vmatmul.f32.gmra.mxu0 %v484
        %v503 = vpop.f32.mrf.mxu0
        %v504 = vadd.f32 0.0, %v503
        %505 = vdwg.mxu0
        %v506 = vrcp.pop %v478
        %v507 = vmul.f32 %v478, %v506
        %v508 = vsub.f32 1.0, %v507
        %v509 = vmul.f32 %v506, %v508
        %v510 = vadd.f32 %v506, %v509
        %vm511 = vweird.f32 %v478
        %vm512 = vweird.f32 %v506
        %vm513 = vmor %vm511, %vm512
        %v514 = vsel %vm513, %v506, %v510
        %v515 = vand.u32 2147483647, %v478
        %vm516 = vcmp.eq.f32.partialorder %v515, 8.507059e+37
        %v517 = vand.u32 %v478, 2147483648
        %v518 = vor.u32 1.1754944e-38, %v517
        %v519 = vsel %vm516, %v518, %v514
        %v520 = vmul.f32 %v504, %v519
        %521 = vrot.lane.b32.xlu0 %v428, 120
        %v522 = vpop.permute.xlu0 %521
        %523 = vrot.lane.b32.xlu0 %v421, 104
        %v524 = vpop.permute.xlu0 %523
        %v525 = vsel %vm444, %v522, 0
        %v527 = vsel %vm444, %v524, 0
        %529 = vmatpush.xpose.msra.mxu0 0.0
        %530 = vmatpush.xpose.msra.mxu0 0.0
        %531 = vmatpush.xpose.msra.mxu0 0.0
        %532 = vmatpush.xpose.msra.mxu0 0.0
        %533 = vmatpush.xpose.msra.mxu0 0.0
        %534 = vmatpush.xpose.msra.mxu0 0.0
        %535 = vmatpush.xpose.msra.mxu0 0.0
        %536 = vmatpush.xpose.msra.mxu0 0.0
        %537 = vmatpush.xpose.msra.mxu0 0.0
        %538 = vmatpush.xpose.msra.mxu0 0.0
        %539 = vmatpush.xpose.msra.mxu0 0.0
        %540 = vmatpush.xpose.msra.mxu0 0.0
        %541 = vmatpush.xpose.msra.mxu0 0.0
        %542 = vmatpush.xpose.msra.mxu0 0.0
        %543 = vmatpush.xpose.msra.mxu0 0.0
        %544 = vmatpush.xpose.msra.mxu0 %v527
        %545 = vmatmul.f32.gmra.mxu0 %v525
        %v546 = vpop.f32.mrf.mxu0
        %v547 = vadd.f32 %v439, %v546
        %548 = vdwg.mxu0
        %v549 = vsel %vm444, %v547, -inf
        %550 = vmax.xlane.f32.xlu0 %v549
        %v551 = vpop.xlane.xlu0 %550
        %v552 = vsub.f32 %v547, %v551
        %v553 = vmul.f32 %v552, 1.442695
        %v554 = vpow.pop %v553
        %v555 = vsel %vm444, %v554, 0.0
        %556 = vadd.xlane.f32.xlu0 %v555
        %v557 = vpop.xlane.xlu0 %556
        %558 = vrot.lane.b32.xlu0 %v436, 88
        %v559 = vpop.permute.xlu0 %558
        %v562 = vsel %vm444, %v554, 0
        %564 = vmatpush.msra.mxu0 0.0
        %565 = vmatpush.msra.mxu0 0.0
        %566 = vmatpush.msra.mxu0 0.0
        %567 = vmatpush.msra.mxu0 0.0
        %568 = vmatpush.msra.mxu0 0.0
        %569 = vmatpush.msra.mxu0 0.0
        %570 = vmatpush.msra.mxu0 0.0
        %571 = vmatpush.msra.mxu0 0.0
        %572 = vmatpush.msra.mxu0 0.0
        %573 = vmatpush.msra.mxu0 0.0
        %574 = vmatpush.msra.mxu0 0.0
        %575 = vmatpush.msra.mxu0 0.0
        %576 = vmatpush.msra.mxu0 0.0
        %577 = vmatpush.msra.mxu0 0.0
        %578 = vmatpush.msra.mxu0 0.0
        %579 = vmatpush.msra.mxu0 %v559
        %580 = vmatmul.f32.gmra.mxu0 %v562
        %v581 = vpop.f32.mrf.mxu0
        %v582 = vadd.f32 0.0, %v581
        %583 = vdwg.mxu0
        %v584 = vrcp.pop %v557
        %v585 = vmul.f32 %v557, %v584
        %v586 = vsub.f32 1.0, %v585
        %v587 = vmul.f32 %v584, %v586
        %v588 = vadd.f32 %v584, %v587
        %vm589 = vweird.f32 %v557
        %vm590 = vweird.f32 %v584
        %vm591 = vmor %vm589, %vm590
        %v592 = vsel %vm591, %v584, %v588
        %v593 = vand.u32 2147483647, %v557
        %vm594 = vcmp.eq.f32.partialorder %v593, 8.507059e+37
        %v595 = vand.u32 %v557, 2147483648
        %v596 = vor.u32 1.1754944e-38, %v595
        %v597 = vsel %vm594, %v596, %v592
        %v598 = vmul.f32 %v582, %v597
        %600 = vrot.lane.b32.xlu0 %v598, 8
        %v601 = vpop.permute.xlu0 %600
        %v603 = vsel %vm444, %v520, %v601
        %s604 = smul.u32 %s33, 16
        %s605 = scalar_lea.vmem [#allocation11], %s604
        %v606 = vld [vmem:[%s605] sm:$0xff]
        %v607 = vld [vmem:[%s605 + $0x8] sm:$0xff]
        %vm608 = vcmask 130048
        %v610 = vsel %vm608, %v603, 0
        %612 = vmatpush.msra.mxu0 0.0
        %613 = vmatpush.msra.mxu0 0.0
        %614 = vmatpush.msra.mxu0 0.0
        %615 = vmatpush.msra.mxu0 0.0
        %616 = vmatpush.msra.mxu0 0.0
        %617 = vmatpush.msra.mxu0 0.0
        %618 = vmatpush.msra.mxu0 0.0
        %619 = vmatpush.msra.mxu0 0.0
        %620 = vmatpush.msra.mxu0 0.0
        %621 = vmatpush.msra.mxu0 0.0
        %622 = vmatpush.msra.mxu0 0.0
        %623 = vmatpush.msra.mxu0 0.0
        %624 = vmatpush.msra.mxu0 0.0
        %625 = vmatpush.msra.mxu0 0.0
        %626 = vmatpush.msra.mxu0 %v607
        %627 = vmatpush.msra.mxu0 %v606
        %628 = vmatmul.f32.gmra.mxu0 %v610
        %v629 = vpop.f32.mrf.mxu0
        %v630 = vadd.f32 0.0, %v629
        %631 = vdwg.mxu0
        %p632 = scmp.eq.s32.totalorder %s33, 0
        // Predicated region
        $region69: #{tpu_custom_call.1} parent=47 // pred_check
          %p633 = pneg %p632
        $region70: #{tpu_custom_call.1} parent=47 // pred_check_branch
          %635 = sbr.rel (%p633) target = $region72
        $region71: #{tpu_custom_call.1} parent=47 // pred_region
          %636 = vst.msk [vmem:[#allocation2] sm:$0xff] %vm399, %v630
        $region72: #{tpu_custom_call.1} parent=47 // pred_fallthru
          _
        %p637 = scmp.gt.s32.totalorder %s33, 0
        // Predicated region
        $region73: #{tpu_custom_call.1} parent=47 // pred_check
          %p638 = pneg %p637
        $region74: #{tpu_custom_call.1} parent=47 // pred_check_branch
          %640 = sbr.rel (%p638) target = $region76
        $region75: #{tpu_custom_call.1} parent=47 // pred_region
          %v641 = vld [vmem:[#allocation2] sm:$0xff]
          %v642 = vadd.f32 %v641, %v630
          %643 = vst.msk [vmem:[#allocation2] sm:$0xff] %vm399, %v642
        $region76: #{tpu_custom_call.1} parent=47 // pred_fallthru
          _
        %p644 = scmp.eq.s32.totalorder %s33, 1
        // Predicated region
        $region77: #{tpu_custom_call.1} parent=47 // pred_check
          %p645 = pneg %p644
        $region78: #{tpu_custom_call.1} parent=47 // pred_check_branch
          %647 = sbr.rel (%p645) target = $region80
        $region79: #{tpu_custom_call.1} parent=47 // pred_region
          %v648 = vld [vmem:[#allocation2] sm:$0xff]
          %v649 = vld [vmem:[%s6] sm:$0x1]
          %v651 = vperm.slane %v649, 0
          %v653 = vadd.f32 %v648, %v651
          %654 = vst.msk [vmem:[%s391] sm:$0xff] %vm399, %v653
        $region80: #{tpu_custom_call.1} parent=47 // pred_fallthru
          _
        %s655 = sand.u32 %s205, 1
        %s656 = scalar_lea.sflag [#allocation5], %s655
        %s657 = sand.u32 %s205, 1
        %s658 = smul.addr %s657, 8
        %s659 = scalar_lea.vmem [#allocation12], %s658
        // Predicated region
        $region81: #{tpu_custom_call.1} parent=47 // pred_check
          %p660 = pneg %p215
        $region82: #{tpu_custom_call.1} parent=47 // pred_check_branch
          %662 = sbr.rel (%p660) target = $region84
        $region83: #{tpu_custom_call.1} parent=47 // pred_region
          %664 = vsyncadd %s656, 0
          %s665 = smul.addr %s32, 8
          %s666 = scalar_lea.hbm %s7, %s665
          %s668 = sshll.u32 %s659, 4
          %s669 = int_to_ptr.vmem [resolvable:$true] %s668
          %s670 = sshll.u32 %s666, 4
          %s671 = int_to_ptr.hbm [resolvable:$true] %s670
          %673 = dma.vmem_to_hbm [thread:$0]  %s669, 128, %s671, %s656
        $region84: #{tpu_custom_call.1} parent=47 // pred_fallthru
          _
      $region48: #{tpu_custom_call.1} parent=5 // pred_fallthru
        _
      %p674 = scmp.le.s32.totalorder 2, %s23
      // Predicated region
      $region85: #{tpu_custom_call.1} parent=5 // pred_check
        %p675 = pneg %p674
      $region86: #{tpu_custom_call.1} parent=5 // pred_check_branch
        %677 = sbr.rel (%p675) target = $region88
      $region87: #{tpu_custom_call.1} parent=5 // pred_region
        %s678 = ssub.s32 %s23, 2
        // Predicated region
        $region89: #{tpu_custom_call.1} parent=87 // pred_check
          %p679 = pneg %p221
        $region90: #{tpu_custom_call.1} parent=87 // pred_check_branch
          %681 = sbr.rel (%p679) target = $region92
        $region91: #{tpu_custom_call.1} parent=87 // pred_region
          %s682 = sand.u32 %s206, 1
          %s683 = scalar_lea.sflag [#allocation5], %s682
          %s684 = sand.u32 %s206, 1
          %s685 = smul.addr %s684, 8
          %s686 = scalar_lea.vmem [#allocation12], %s685
          %688 = dma.done %s683, 128
        $region92: #{tpu_custom_call.1} parent=87 // pred_fallthru
          _
      $region88: #{tpu_custom_call.1} parent=5 // pred_fallthru
        _
    $region6: #{tpu_custom_call.1} parent=1 // loop_footer
      %s27 = sadd.s32 1, %s23
    $region7: #{tpu_custom_call.1} parent=1 // loop_footer_branch
      %22 = sbr.rel target = $region3
    $region8: #{tpu_custom_call.1} parent=1 // loop_exit
      _
    %689 = vsyncpa [#allocation4], 1
    %s690 = scalar_lea.sflag [#allocation4], 1
    %691 = vsyncpa %s690, 1
    %692 = vsyncpa [#allocation7], 1
    %s693 = scalar_lea.sflag [#allocation7], 1
    %694 = vsyncpa %s693, 1
    %695 = vsyncpa [#allocation10], 1
    %696 = vsyncpa [#allocation5], 1
    %s697 = scalar_lea.sflag [#allocation5], 1
    %698 = vsyncpa %s697, 1

</llo_original>
